<compile_context>
chip_gen: v7x
topology: tpu7x:2x2x1
jax: 0.10.0
libtpu: 0.0.40
codegen_flags: <defaults>
</compile_context>

<pallas_src>
import math
from functools import partial

import jax
import jax.numpy as jnp
from jax.experimental import pallas as pl
from jax.experimental.pallas import tpu as pltpu


# ---------------------------------------------------------------------------
# Budgets (bytes).  Working sets are double-buffered in + out tiles.
# Kept under the physical VMEM of every generation (64 MiB on v7x) with
# headroom; the explicit vmem_limit_bytes covers v5e's 16 MiB scoped default.
# ---------------------------------------------------------------------------
_FUSED_VMEM_BUDGET = 24 * 1024 * 1024    # 4 * C * HW * 4 must fit here
_STREAM_VMEM_BUDGET = 24 * 1024 * 1024   # 4 * C * T  * 4 must fit here
_VMEM_LIMIT_BYTES = 40 * 1024 * 1024


# ---------------------------------------------------------------------------
# Shared SE math (tiny): pooled (C,1) -> scale (C,1).
# Uses only VPU broadcasts + small reduces; weights are laid out so no
# transpose / relayout is ever needed inside the kernel:
#   w1t : (C, Cr)  == W1^T          b1 : (1, Cr)
#   w2  : (C, Cr)  == W2 (as-is)    b2 : (C, 1)
# ---------------------------------------------------------------------------
def _se_scale(pooled, w1t, b1, w2, b2):
    h = jnp.sum(w1t * pooled, axis=0, keepdims=True) + b1      # (1, Cr)
    h = jnp.maximum(h, 0.0)
    s = jnp.sum(w2 * h, axis=1, keepdims=True) + b2             # (C, 1)
    return jax.nn.sigmoid(s)                                    # (C, 1)


# ---------------------------------------------------------------------------
# Fused single-pass kernel: grid (N,), per-sample slab resident in VMEM.
# ---------------------------------------------------------------------------
def _fused_kernel(x_ref, w1t_ref, b1_ref, w2_ref, b2_ref, o_ref, *, inv_hw):
    x = x_ref[...]                                              # (1, C, HW)
    pooled = jnp.sum(x.astype(jnp.float32), axis=2, keepdims=True)[0] * inv_hw
    s = _se_scale(pooled, w1t_ref[...], b1_ref[...], w2_ref[...], b2_ref[...])
    o_ref[...] = (x * s[None].astype(x.dtype)).astype(o_ref.dtype)


# ---------------------------------------------------------------------------
# Streaming pass 1: spatial sum accumulated in the (1, C, 1) output block,
# SE FC stack evaluated once per sample in the finalize branch.
# ---------------------------------------------------------------------------
def _pool_se_kernel(x_ref, w1t_ref, b1_ref, w2_ref, b2_ref, s_ref, *, inv_hw):
    t = pl.program_id(1)

    @pl.when(t == 0)
    def _():
        s_ref[...] = jnp.zeros_like(s_ref)

    # (1, C, T): lane-axis reduce keeps C on sublanes (no relayout).
    s_ref[...] += jnp.sum(x_ref[...].astype(jnp.float32), axis=2, keepdims=True)

    @pl.when(t == pl.num_programs(1) - 1)
    def _():
        pooled = s_ref[0] * inv_hw                              # (C, 1)
        s_ref[0] = _se_scale(pooled, w1t_ref[...], b1_ref[...],
                             w2_ref[...], b2_ref[...])


# ---------------------------------------------------------------------------
# Streaming pass 2: out = x * s, lane-dense tiles, pure HBM streaming.
# ---------------------------------------------------------------------------
def _rescale_kernel(s_ref, x_ref, o_ref):
    o_ref[...] = (x_ref[...] * s_ref[...].astype(x_ref.dtype)).astype(o_ref.dtype)


def _stream_tile(hw, c, itemsize=4):
    """Pick (hw_padded, T) for the streaming path.

    T is the largest lane-dense (multiple of 128) tile whose double-buffered
    in+out working set (4*C*T*itemsize) fits the budget.  Prefer a T that
    divides HW exactly; otherwise zero-pad HW up to a multiple of T.
    """
    max_t = _STREAM_VMEM_BUDGET // (4 * c * itemsize)
    max_t = max(128, (max_t // 128) * 128)
    if hw <= max_t:
        return hw, hw                       # single full-extent tile / sample
    best = 0
    t = 128
    while t <= max_t:
        if hw % t == 0:
            best = t
        t += 128
    if best >= min(max_t, 4096):
        return hw, best                     # good dividing tile, no padding
    hw_pad = -(-hw // max_t) * max_t        # pad; zeros don't change the sum
    return hw_pad, max_t


def ca_layer(x, w1, b1, w2, b2, *, force_stream=False):
    """CALayer forward.
    x: (N, C, H, W).  w1: (Cr, C), b1: (Cr,), w2: (C, Cr), b2: (C,)."""
    N, C, H, W = x.shape
    Cr = w1.shape[0]
    HW = H * W
    inv_hw = 1.0 / HW

    x_flat = x.reshape(N, C, HW)
    w1t = jnp.asarray(w1, jnp.float32).T            # (C, Cr)
    b1r = jnp.asarray(b1, jnp.float32).reshape(1, Cr)
    w2r = jnp.asarray(w2, jnp.float32)              # (C, Cr)
    b2r = jnp.asarray(b2, jnp.float32).reshape(C, 1)

    itemsize = jnp.dtype(x.dtype).itemsize
    fused_working_set = 4 * C * HW * itemsize       # 2x in + 2x out slabs

    cparams = pltpu.CompilerParams(
        dimension_semantics=("parallel",),
        vmem_limit_bytes=_VMEM_LIMIT_BYTES)

    # ---- fast path: single kernel, x read once, written once ---------------
    if fused_working_set <= _FUSED_VMEM_BUDGET and not force_stream:
        out = pl.pallas_call(
            partial(_fused_kernel, inv_hw=inv_hw),
            out_shape=jax.ShapeDtypeStruct((N, C, HW), x.dtype),
            grid_spec=pltpu.PrefetchScalarGridSpec(
                num_scalar_prefetch=0,
                grid=(N,),
                in_specs=[
                    pl.BlockSpec((1, C, HW), lambda n: (n, 0, 0)),   # x slab
                    pl.BlockSpec((C, Cr),    lambda n: (0, 0)),      # W1^T
                    pl.BlockSpec((1, Cr),    lambda n: (0, 0)),      # b1
                    pl.BlockSpec((C, Cr),    lambda n: (0, 0)),      # W2
                    pl.BlockSpec((C, 1),     lambda n: (0, 0)),      # b2
                ],
                out_specs=pl.BlockSpec((1, C, HW), lambda n: (n, 0, 0)),
            ),
            compiler_params=cparams,
        )(x_flat, w1t, b1r, w2r, b2r)
        return out.reshape(N, C, H, W)

    # ---- fallback: streaming two-pass path for very large feature maps -----
    # TODO(synk): on v7x with N == 1 both passes use a single TensorCore;
    # splitting the HW axis across cores would recover the second TC.
    hw_pad, T = _stream_tile(HW, C, itemsize)
    xp = x_flat
    if hw_pad != HW:
        xp = jnp.pad(x_flat, ((0, 0), (0, 0), (0, hw_pad - HW)))
    n_t = hw_pad // T

    s = pl.pallas_call(
        partial(_pool_se_kernel, inv_hw=inv_hw),
        out_shape=jax.ShapeDtypeStruct((N, C, 1), jnp.float32),
        grid_spec=pltpu.PrefetchScalarGridSpec(
            num_scalar_prefetch=0,
            grid=(N, n_t),
            in_specs=[
                pl.BlockSpec((1, C, T), lambda n, t: (n, 0, t)),     # x tile
                pl.BlockSpec((C, Cr),   lambda n, t: (0, 0)),        # W1^T
                pl.BlockSpec((1, Cr),   lambda n, t: (0, 0)),        # b1
                pl.BlockSpec((C, Cr),   lambda n, t: (0, 0)),        # W2
                pl.BlockSpec((C, 1),    lambda n, t: (0, 0)),        # b2
            ],
            out_specs=pl.BlockSpec((1, C, 1), lambda n, t: (n, 0, 0)),
        ),
        compiler_params=pltpu.CompilerParams(
            dimension_semantics=("parallel", "arbitrary"),
            vmem_limit_bytes=_VMEM_LIMIT_BYTES),
    )(xp, w1t, b1r, w2r, b2r)

    outp = pl.pallas_call(
        _rescale_kernel,
        out_shape=jax.ShapeDtypeStruct((N, C, hw_pad), x.dtype),
        grid_spec=pltpu.PrefetchScalarGridSpec(
            num_scalar_prefetch=0,
            grid=(N, n_t),
            in_specs=[
                pl.BlockSpec((1, C, 1), lambda n, t: (n, 0, 0)),     # scale
                pl.BlockSpec((1, C, T), lambda n, t: (n, 0, t)),     # x tile
            ],
            out_specs=pl.BlockSpec((1, C, T), lambda n, t: (n, 0, t)),
        ),
        compiler_params=pltpu.CompilerParams(
            dimension_semantics=("parallel", "parallel"),
            vmem_limit_bytes=_VMEM_LIMIT_BYTES),
    )(s, xp)

    out = outp[:, :, :HW] if hw_pad != HW else outp
    return out.reshape(N, C, H, W)


def _reference(x, w1, b1, w2, b2):
    # Pure-JAX reference matching PyTorch CALayer semantics.
    y = jnp.mean(x, axis=(2, 3))                        # (N, C)
    h = jax.nn.relu(y @ w1.T + b1)                      # (N, Cr)
    s = jax.nn.sigmoid(h @ w2.T + b2)                   # (N, C)
    return x * s[:, :, None, None]


if __name__ == "__main__":
    # Small shapes consistent with CALayer(channel=64, reduction=16).
    N, C, H, W = 2, 64, 16, 16
    reduction = 16
    Cr = C // reduction

    key = jax.random.PRNGKey(0)
    kx, k1, k2, k3, k4 = jax.random.split(key, 5)

    x = jax.random.normal(kx, (N, C, H, W), dtype=jnp.float32)

    # Deterministic PyTorch-style init for the two 1x1 convs.
    bound1 = 1.0 / math.sqrt(C)
    w1 = jax.random.uniform(k1, (Cr, C), jnp.float32, -bound1, bound1)
    b1 = jax.random.uniform(k2, (Cr,),   jnp.float32, -bound1, bound1)
    bound2 = 1.0 / math.sqrt(Cr)
    w2 = jax.random.uniform(k3, (C, Cr), jnp.float32, -bound2, bound2)
    b2 = jax.random.uniform(k4, (C,),    jnp.float32, -bound2, bound2)

    ref = _reference(x, w1, b1, w2, b2)

    # Fast (fused) path.
    out = jax.block_until_ready(ca_layer(x, w1, b1, w2, b2))
    assert out.shape == (N, C, H, W)
    assert jnp.allclose(out, ref, atol=1e-5, rtol=1e-5), "fused path mismatch"

    # Streaming fallback path (exercised explicitly for coverage).
    out_s = jax.block_until_ready(ca_layer(x, w1, b1, w2, b2, force_stream=True))
    assert jnp.allclose(out_s, ref, atol=1e-5, rtol=1e-5), "stream path mismatch"

    print("KERNEL_OK")
</pallas_src>

<mosaic_0001>
module attributes {stable_mosaic.version = 11 : i64} {
  func.func @_fused_kernel(%arg0: i32, %arg1: memref<1x64x256xf32, #tpu.memory_space<vmem>>, %arg2: memref<64x4xf32, #tpu.memory_space<vmem>>, %arg3: memref<1x4xf32, #tpu.memory_space<vmem>>, %arg4: memref<64x4xf32, #tpu.memory_space<vmem>>, %arg5: memref<64x1xf32, #tpu.memory_space<vmem>>, %arg6: memref<1x64x256xf32, #tpu.memory_space<vmem>>) attributes {dimension_semantics = [#tpu.dimension_semantics<parallel>], iteration_bounds = array<i64: 2>, scalar_prefetch = 0 : i64, scratch_operands = 0 : i64, tpu.core_type = #tpu.core_type<tc>, window_params = [{transform_indices = @transform_0, window_bounds = array<i64: 1, 64, 256>}, {pipeline_mode = #tpu.pipeline_mode<synchronous>, transform_indices = @transform_1, window_bounds = array<i64: 64, 4>}, {pipeline_mode = #tpu.pipeline_mode<synchronous>, transform_indices = @transform_2, window_bounds = array<i64: 1, 4>}, {pipeline_mode = #tpu.pipeline_mode<synchronous>, transform_indices = @transform_3, window_bounds = array<i64: 64, 4>}, {pipeline_mode = #tpu.pipeline_mode<synchronous>, transform_indices = @transform_4, window_bounds = array<i64: 64, 1>}, {transform_indices = @transform_5, window_bounds = array<i64: 1, 64, 256>}]} {
    %c0 = arith.constant 0 : index
    %c0_0 = arith.constant 0 : index
    %c0_1 = arith.constant 0 : index
    %0 = vector.load %arg1[%c0, %c0_0, %c0_1] : memref<1x64x256xf32, #tpu.memory_space<vmem>>, vector<1x64x256xf32>
    %cst = arith.constant dense<0.000000e+00> : vector<1x64xf32>
    %1 = vector.multi_reduction <add>, %0, %cst [2] : vector<1x64x256xf32> to vector<1x64xf32>
    %2 = vector.shape_cast %1 : vector<1x64xf32> to vector<1x64x1xf32>
    %3 = vector.shape_cast %2 : vector<1x64x1xf32> to vector<64x1xf32>
    %cst_2 = arith.constant 3.906250e-03 : f32
    %4 = vector.broadcast %cst_2 : f32 to vector<64x1xf32>
    %5 = arith.mulf %3, %4 : vector<64x1xf32>
    %c0_3 = arith.constant 0 : index
    %c0_4 = arith.constant 0 : index
    %6 = vector.load %arg2[%c0_3, %c0_4] : memref<64x4xf32, #tpu.memory_space<vmem>>, vector<64x4xf32>
    %c0_5 = arith.constant 0 : index
    %c0_6 = arith.constant 0 : index
    %7 = vector.load %arg3[%c0_5, %c0_6] : memref<1x4xf32, #tpu.memory_space<vmem>>, vector<1x4xf32>
    %c0_7 = arith.constant 0 : index
    %c0_8 = arith.constant 0 : index
    %8 = vector.load %arg4[%c0_7, %c0_8] : memref<64x4xf32, #tpu.memory_space<vmem>>, vector<64x4xf32>
    %c0_9 = arith.constant 0 : index
    %c0_10 = arith.constant 0 : index
    %9 = vector.load %arg5[%c0_9, %c0_10] : memref<64x1xf32, #tpu.memory_space<vmem>>, vector<64x1xf32>
    %10 = vector.broadcast %5 : vector<64x1xf32> to vector<64x4xf32>
    %11 = arith.mulf %6, %10 : vector<64x4xf32>
    %cst_11 = arith.constant dense<0.000000e+00> : vector<4xf32>
    %12 = vector.multi_reduction <add>, %11, %cst_11 [0] : vector<64x4xf32> to vector<4xf32>
    %13 = vector.shape_cast %12 : vector<4xf32> to vector<1x4xf32>
    %14 = arith.addf %13, %7 : vector<1x4xf32>
    %cst_12 = arith.constant 0.000000e+00 : f32
    %15 = vector.broadcast %cst_12 : f32 to vector<1x4xf32>
    %16 = arith.maximumf %14, %15 : vector<1x4xf32>
    %17 = vector.broadcast %16 : vector<1x4xf32> to vector<64x4xf32>
    %18 = arith.mulf %8, %17 : vector<64x4xf32>
    %cst_13 = arith.constant dense<0.000000e+00> : vector<64xf32>
    %19 = vector.multi_reduction <add>, %18, %cst_13 [1] : vector<64x4xf32> to vector<64xf32>
    %20 = vector.shape_cast %19 : vector<64xf32> to vector<64x1xf32>
    %21 = arith.addf %20, %9 : vector<64x1xf32>
    %22 = arith.negf %21 : vector<64x1xf32>
    %23 = math.exp %22 : vector<64x1xf32>
    %cst_14 = arith.constant 1.000000e+00 : f32
    %24 = vector.broadcast %cst_14 : f32 to vector<64x1xf32>
    %25 = arith.addf %24, %23 : vector<64x1xf32>
    %26 = arith.divf %24, %25 : vector<64x1xf32>
    %27 = vector.shape_cast %26 : vector<64x1xf32> to vector<1x64x1xf32>
    %28 = vector.broadcast %27 : vector<1x64x1xf32> to vector<1x64x256xf32>
    %29 = arith.mulf %0, %28 : vector<1x64x256xf32>
    %c0_15 = arith.constant 0 : index
    %c0_16 = arith.constant 0 : index
    %c0_17 = arith.constant 0 : index
    %30 = vector.load %arg6[%c0_15, %c0_16, %c0_17] : memref<1x64x256xf32, #tpu.memory_space<vmem>>, vector<1x64x256xf32>
    tpu.vector_store %arg6[%c0_15, %c0_16, %c0_17], %29 {strides = array<i32>} : memref<1x64x256xf32, #tpu.memory_space<vmem>>, vector<1x64x256xf32>,
    return
  }
  func.func @transform_0(%arg0: i32) -> (i32, i32, i32) {
    %c0_i32 = arith.constant 0 : i32
    %c0_i32_0 = arith.constant 0 : i32
    %c0_i32_1 = arith.constant 0 : i32
    return %arg0, %c0_i32, %c0_i32_0 : i32, i32, i32
  }
  func.func @transform_1(%arg0: i32) -> (i32, i32) {
    %c0_i32 = arith.constant 0 : i32
    %c0_i32_0 = arith.constant 0 : i32
    %c0_i32_1 = arith.constant 0 : i32
    return %c0_i32, %c0_i32_0 : i32, i32
  }
  func.func @transform_2(%arg0: i32) -> (i32, i32) {
    %c0_i32 = arith.constant 0 : i32
    %c0_i32_0 = arith.constant 0 : i32
    %c0_i32_1 = arith.constant 0 : i32
    return %c0_i32, %c0_i32_0 : i32, i32
  }
  func.func @transform_3(%arg0: i32) -> (i32, i32) {
    %c0_i32 = arith.constant 0 : i32
    %c0_i32_0 = arith.constant 0 : i32
    %c0_i32_1 = arith.constant 0 : i32
    return %c0_i32, %c0_i32_0 : i32, i32
  }
  func.func @transform_4(%arg0: i32) -> (i32, i32) {
    %c0_i32 = arith.constant 0 : i32
    %c0_i32_0 = arith.constant 0 : i32
    %c0_i32_1 = arith.constant 0 : i32
    return %c0_i32, %c0_i32_0 : i32, i32
  }
  func.func @transform_5(%arg0: i32) -> (i32, i32, i32) {
    %c0_i32 = arith.constant 0 : i32
    %c0_i32_0 = arith.constant 0 : i32
    %c0_i32_1 = arith.constant 0 : i32
    return %arg0, %c0_i32, %c0_i32_0 : i32, i32, i32
  }
}

</mosaic_0001>

<llo_original>
// kernel: tpu_custom_call.1
$region0: #{tpu_custom_call.1}
  #allocation0 [shape = 'u32[]', space=smem, size = 0x4, offset = 0x4, fixed_abs, tag = 'smem constant byte address 0x4 - core index']
  #allocation1 [shape = 'u32[144,128]{1,0:T(1,128)}', space=vmem, size = 0x12000, scoped, tag = 'internal scratch']
  %s0 = inlined_call_operand.hbm [shape: f32[2,64,256], index: 0, kind: input, shape index: {}]
  %s1 = inlined_call_operand.vmem [shape: f32[64,4], index: 1, kind: input, shape index: {}]
  %s2 = inlined_call_operand.vmem [shape: f32[1,4], index: 2, kind: input, shape index: {}]
  %s3 = inlined_call_operand.vmem [shape: f32[64,4], index: 3, kind: input, shape index: {}]
  %s4 = inlined_call_operand.vmem [shape: f32[64,1], index: 4, kind: input, shape index: {}]
  %s5 = inlined_call_operand.hbm [shape: f32[2,64,256], index: 5, kind: output, shape index: {}]
  %s6 = sld [smem:[#allocation0]]
  $region57: #{tpu_custom_call.1} parent=0
    _
  %s8 = ssub.s32 1, %s6
  %s9 = scalar_select 0, %s8, %s6
  $region1: #{tpu_custom_call.1} parent=0
    #allocation2 [shape = 'u8[131072]{0}', space=vmem, size = 0x20000, scoped, tag = 'input window, operand 0']
    #allocation3 [shape = 's32[2]{0}', space=sflag, size = 0x8, scoped, tag = 'scoped memory for tpu_custom_call.1']
    #allocation4 [shape = 's32[2]{0}', space=sflag, size = 0x8, scoped, tag = 'scoped memory for tpu_custom_call.1']
    #allocation5 [shape = 'u8[131072]{0}', space=vmem, size = 0x20000, scoped, tag = 'output window, operand 0']
    %10 = vsyncpa [#allocation3], 0
    %s11 = scalar_lea.sflag [#allocation3], 1
    %12 = vsyncpa %s11, 0
    %13 = vsyncpa [#allocation4], 0
    %s14 = scalar_lea.sflag [#allocation4], 1
    %15 = vsyncpa %s14, 0
    loop: start=0, step=1, limit=4
    $region2: #{tpu_custom_call.1} parent=1 // loop_pre_header
      _
    $region3: #{tpu_custom_call.1} parent=1 // loop_header
      %s17 = sphi 0, %s21
      %p18 = scmp.ge.s32.totalorder %s17, 4
      %s27 = sphi 0, %s29
      %s30 = sphi 0, %s27
      %s31 = sphi 0, %s30
      %s47 = sphi 0, %s31
      %s51 = sphi 0, %s51
      %s53 = sphi 0, %s51
      %s54 = sphi 0, %s53
      %s68 = sphi 0, %s54
      %s72 = sphi 0, %s72
      %s74 = sphi 0, %s72
      %s75 = sphi 0, %s74
      %s89 = sphi 0, %s75
      %s93 = sphi 0, %s93
      %s95 = sphi 0, %s93
      %s96 = sphi 0, %s95
      %s110 = sphi 0, %s96
      %s114 = sphi 0, %s114
      %s116 = sphi 0, %s114
      %s117 = sphi 0, %s116
      %s131 = sphi 0, %s117
      %s137 = sphi 0, %s139
      %s140 = sphi 0, %s137
      %s141 = sphi 0, %s140
      %s157 = sphi 0, %s141
    $region4: #{tpu_custom_call.1} parent=1 // loop_header_branch
      %20 = sbr.rel (%p18) target = $region8
    $region5: #{tpu_custom_call.1} parent=1 // loop_body
      %s22 = ssub.s32 %s17, 1
      %s23 = ssub.s32 %s17, 2
      %s24 = sadd.s32 %s17, 1
      %s25 = ssub.s32 %s17, %s24
      %p26 = scmp.eq.s32.totalorder %s25, 0
      %s28 = sadd.s32 %s27, 1
      %s29 = scalar_select %p26, %s27, %s28
      %p32 = pneg %p26
      %p33 = scmp.eq.s32.totalorder %s17, 1
      %p34 = por %p32, %p33
      %p35 = scmp.ne.s32.totalorder %s27, %s30
      %p36 = scmp.eq.s32.totalorder %s17, 0
      %p37 = por %p35, %p36
      %p38 = scmp.ne.s32.totalorder %s27, %s30
      %p39 = scmp.eq.s32.totalorder %s22, 1
      %p40 = por %p38, %p39
      %p41 = scmp.ne.s32.totalorder %s30, %s31
      %p42 = scmp.eq.s32.totalorder %s22, 0
      %p43 = por %p41, %p42
      %p44 = scmp.ne.s32.totalorder %s30, %s31
      %p45 = scmp.eq.s32.totalorder %s23, 1
      %p46 = por %p44, %p45
      %p48 = scmp.ne.s32.totalorder %s31, %s47
      %p49 = scmp.eq.s32.totalorder %s23, 0
      %p50 = por %p48, %p49
      %s52 = sadd.s32 %s51, 1
      %p55 = scmp.eq.s32.totalorder %s17, 1
      %p56 = scmp.ne.s32.totalorder %s51, %s53
      %p57 = scmp.eq.s32.totalorder %s17, 0
      %p58 = por %p56, %p57
      %p59 = scmp.ne.s32.totalorder %s51, %s53
      %p60 = scmp.eq.s32.totalorder %s22, 1
      %p61 = por %p59, %p60
      %p62 = scmp.ne.s32.totalorder %s53, %s54
      %p63 = scmp.eq.s32.totalorder %s22, 0
      %p64 = por %p62, %p63
      %p65 = scmp.ne.s32.totalorder %s53, %s54
      %p66 = scmp.eq.s32.totalorder %s23, 1
      %p67 = por %p65, %p66
      %p69 = scmp.ne.s32.totalorder %s54, %s68
      %p70 = scmp.eq.s32.totalorder %s23, 0
      %p71 = por %p69, %p70
      %s73 = sadd.s32 %s72, 1
      %p76 = scmp.eq.s32.totalorder %s17, 1
      %p77 = scmp.ne.s32.totalorder %s72, %s74
      %p78 = scmp.eq.s32.totalorder %s17, 0
      %p79 = por %p77, %p78
      %p80 = scmp.ne.s32.totalorder %s72, %s74
      %p81 = scmp.eq.s32.totalorder %s22, 1
      %p82 = por %p80, %p81
      %p83 = scmp.ne.s32.totalorder %s74, %s75
      %p84 = scmp.eq.s32.totalorder %s22, 0
      %p85 = por %p83, %p84
      %p86 = scmp.ne.s32.totalorder %s74, %s75
      %p87 = scmp.eq.s32.totalorder %s23, 1
      %p88 = por %p86, %p87
      %p90 = scmp.ne.s32.totalorder %s75, %s89
      %p91 = scmp.eq.s32.totalorder %s23, 0
      %p92 = por %p90, %p91
      %s94 = sadd.s32 %s93, 1
      %p97 = scmp.eq.s32.totalorder %s17, 1
      %p98 = scmp.ne.s32.totalorder %s93, %s95
      %p99 = scmp.eq.s32.totalorder %s17, 0
      %p100 = por %p98, %p99
      %p101 = scmp.ne.s32.totalorder %s93, %s95
      %p102 = scmp.eq.s32.totalorder %s22, 1
      %p103 = por %p101, %p102
      %p104 = scmp.ne.s32.totalorder %s95, %s96
      %p105 = scmp.eq.s32.totalorder %s22, 0
      %p106 = por %p104, %p105
      %p107 = scmp.ne.s32.totalorder %s95, %s96
      %p108 = scmp.eq.s32.totalorder %s23, 1
      %p109 = por %p107, %p108
      %p111 = scmp.ne.s32.totalorder %s96, %s110
      %p112 = scmp.eq.s32.totalorder %s23, 0
      %p113 = por %p111, %p112
      %s115 = sadd.s32 %s114, 1
      %p118 = scmp.eq.s32.totalorder %s17, 1
      %p119 = scmp.ne.s32.totalorder %s114, %s116
      %p120 = scmp.eq.s32.totalorder %s17, 0
      %p121 = por %p119, %p120
      %p122 = scmp.ne.s32.totalorder %s114, %s116
      %p123 = scmp.eq.s32.totalorder %s22, 1
      %p124 = por %p122, %p123
      %p125 = scmp.ne.s32.totalorder %s116, %s117
      %p126 = scmp.eq.s32.totalorder %s22, 0
      %p127 = por %p125, %p126
      %p128 = scmp.ne.s32.totalorder %s116, %s117
      %p129 = scmp.eq.s32.totalorder %s23, 1
      %p130 = por %p128, %p129
      %p132 = scmp.ne.s32.totalorder %s117, %s131
      %p133 = scmp.eq.s32.totalorder %s23, 0
      %p134 = por %p132, %p133
      %s135 = ssub.s32 %s17, %s24
      %p136 = scmp.eq.s32.totalorder %s135, 0
      %s138 = sadd.s32 %s137, 1
      %s139 = scalar_select %p136, %s137, %s138
      %p142 = pneg %p136
      %p143 = scmp.eq.s32.totalorder %s17, 1
      %p144 = por %p142, %p143
      %p145 = scmp.ne.s32.totalorder %s137, %s140
      %p146 = scmp.eq.s32.totalorder %s17, 0
      %p147 = por %p145, %p146
      %p148 = scmp.ne.s32.totalorder %s137, %s140
      %p149 = scmp.eq.s32.totalorder %s22, 1
      %p150 = por %p148, %p149
      %p151 = scmp.ne.s32.totalorder %s140, %s141
      %p152 = scmp.eq.s32.totalorder %s22, 0
      %p153 = por %p151, %p152
      %p154 = scmp.ne.s32.totalorder %s140, %s141
      %p155 = scmp.eq.s32.totalorder %s23, 1
      %p156 = por %p154, %p155
      %p158 = scmp.ne.s32.totalorder %s141, %s157
      %p159 = scmp.eq.s32.totalorder %s23, 0
      %p160 = por %p158, %p159
      %p161 = scmp.le.s32.totalorder 1, %s17
      %p162 = scmp.lt.s32.totalorder %s17, 3
      %p163 = pnand %p161, %p162
      %p164 = pneg %p163
      // Predicated region
      $region9: #{tpu_custom_call.1} parent=5 // pred_check
        _
      $region10: #{tpu_custom_call.1} parent=5 // pred_check_branch
        %166 = sbr.rel (%p163) target = $region12
      $region11: #{tpu_custom_call.1} parent=5 // pred_region
        %s167 = ssub.s32 %s17, 1
        // Predicated region
        $region13: #{tpu_custom_call.1} parent=11 // pred_check
          %p168 = pneg %p64
        $region14: #{tpu_custom_call.1} parent=11 // pred_check_branch
          %170 = sbr.rel (%p168) target = $region16
        $region15: #{tpu_custom_call.1} parent=11 // pred_region
          _
        $region16: #{tpu_custom_call.1} parent=11 // pred_fallthru
          _
        // Predicated region
        $region17: #{tpu_custom_call.1} parent=11 // pred_check
          %p171 = pneg %p85
        $region18: #{tpu_custom_call.1} parent=11 // pred_check_branch
          %173 = sbr.rel (%p171) target = $region20
        $region19: #{tpu_custom_call.1} parent=11 // pred_region
          _
        $region20: #{tpu_custom_call.1} parent=11 // pred_fallthru
          _
        // Predicated region
        $region21: #{tpu_custom_call.1} parent=11 // pred_check
          %p174 = pneg %p106
        $region22: #{tpu_custom_call.1} parent=11 // pred_check_branch
          %176 = sbr.rel (%p174) target = $region24
        $region23: #{tpu_custom_call.1} parent=11 // pred_region
          _
        $region24: #{tpu_custom_call.1} parent=11 // pred_fallthru
          _
        // Predicated region
        $region25: #{tpu_custom_call.1} parent=11 // pred_check
          %p177 = pneg %p127
        $region26: #{tpu_custom_call.1} parent=11 // pred_check_branch
          %179 = sbr.rel (%p177) target = $region28
        $region27: #{tpu_custom_call.1} parent=11 // pred_region
          _
        $region28: #{tpu_custom_call.1} parent=11 // pred_fallthru
          _
      $region12: #{tpu_custom_call.1} parent=5 // pred_fallthru
        _
      %p180 = scmp.lt.s32.totalorder %s17, 2
      // Predicated region
      $region29: #{tpu_custom_call.1} parent=5 // pred_check
        %p181 = pneg %p180
      $region30: #{tpu_custom_call.1} parent=5 // pred_check_branch
        %183 = sbr.rel (%p181) target = $region32
      $region31: #{tpu_custom_call.1} parent=5 // pred_region
        // Predicated region
        $region33: #{tpu_custom_call.1} parent=31 // pred_check
          %p184 = pneg %p37
        $region34: #{tpu_custom_call.1} parent=31 // pred_check_branch
          %186 = sbr.rel (%p184) target = $region36
        $region35: #{tpu_custom_call.1} parent=31 // pred_region
          %s187 = sand.u32 %s27, 1
          %s188 = scalar_lea.sflag [#allocation3], %s187
          %s189 = sand.u32 %s27, 1
          %s190 = smul.addr %s189, 128
          %s191 = scalar_lea.vmem [#allocation2], %s190
          %s193 = ssub.s32 2048, 2048
          %194 = vsyncadd %s188, %s193
          %s195 = smul.addr %s17, 16
          %s196 = smul.addr %s195, 128
          %s197 = scalar_lea.hbm %s0, %s196
          %s198 = sshll.u32 %s191, 4
          %s199 = int_to_ptr.vmem [resolvable:$true] %s198
          %204 = dma.hbm_to_vmem [thread:$0]  %s197, 2048, %s199, %s188, 256, 256, 16
        $region36: #{tpu_custom_call.1} parent=31 // pred_fallthru
          _
      $region32: #{tpu_custom_call.1} parent=5 // pred_fallthru
        _
      %p205 = scmp.le.s32.totalorder 1, %s17
      %p206 = scmp.lt.s32.totalorder %s17, 3
      %p207 = pnand %p205, %p206
      %p208 = pneg %p207
      // Predicated region
      $region37: #{tpu_custom_call.1} parent=5 // pred_check
        _
      $region38: #{tpu_custom_call.1} parent=5 // pred_check_branch
        %210 = sbr.rel (%p207) target = $region40
      $region39: #{tpu_custom_call.1} parent=5 // pred_region
        %s211 = ssub.s32 %s17, 1
        %s212 = sand.u32 %s30, 1
        %s213 = scalar_lea.sflag [#allocation3], %s212
        %s214 = sand.u32 %s30, 1
        %s215 = smul.addr %s214, 128
        %s216 = scalar_lea.vmem [#allocation2], %s215
        // Predicated region
        $region41: #{tpu_custom_call.1} parent=39 // pred_check
          %p217 = pneg %p43
        $region42: #{tpu_custom_call.1} parent=39 // pred_check_branch
          %219 = sbr.rel (%p217) target = $region44
        $region43: #{tpu_custom_call.1} parent=39 // pred_region
          %220 = dma.done %s213, 2048
        $region44: #{tpu_custom_call.1} parent=39 // pred_fallthru
          _
        %s221 = sand.u32 %s30, 1
        %s222 = scalar_lea.sflag [#allocation3], %s221
        %s223 = sand.u32 %s30, 1
        %s224 = smul.addr %s223, 128
        %s225 = scalar_lea.vmem [#allocation2], %s224
        %p226 = pneg %p43
        %p227 = pneg %p40
        %p228 = pneg %p64
        %p229 = pneg %p61
        %p230 = pneg %p85
        %p231 = pneg %p82
        %p232 = pneg %p106
        %p233 = pneg %p103
        %p234 = pneg %p127
        %p235 = pneg %p124
        %p236 = pneg %p153
        %p237 = pneg %p150
        %s238 = sand.u32 %s140, 1
        %s239 = scalar_lea.sflag [#allocation4], %s238
        %s240 = sand.u32 %s140, 1
        %s241 = smul.addr %s240, 128
        %s242 = scalar_lea.vmem [#allocation5], %s241
        %v243 = vld [vmem:[%s216] sm:$0xff]
        %v244 = vld [vmem:[%s216 + $0x8] sm:$0xff]
        %v245 = vld [vmem:[%s216 + $0x10] sm:$0xff]
        %v246 = vld [vmem:[%s216 + $0x18] sm:$0xff]
        %v247 = vld [vmem:[%s216 + $0x20] sm:$0xff]
        %v248 = vld [vmem:[%s216 + $0x28] sm:$0xff]
        %v249 = vld [vmem:[%s216 + $0x30] sm:$0xff]
        %v250 = vld [vmem:[%s216 + $0x38] sm:$0xff]
        %v251 = vld [vmem:[%s216 + $0x40] sm:$0xff]
        %v252 = vld [vmem:[%s216 + $0x48] sm:$0xff]
        %v253 = vld [vmem:[%s216 + $0x50] sm:$0xff]
        %v254 = vld [vmem:[%s216 + $0x58] sm:$0xff]
        %v255 = vld [vmem:[%s216 + $0x60] sm:$0xff]
        %v256 = vld [vmem:[%s216 + $0x68] sm:$0xff]
        %v257 = vld [vmem:[%s216 + $0x70] sm:$0xff]
        %v258 = vld [vmem:[%s216 + $0x78] sm:$0xff]
        %v259 = vadd.f32 %v243, %v244
        %260 = vadd.xlane.f32.xlu0 %v259
        %v261 = vpop.xlane.xlu0 %260
        %v262 = vadd.f32 %v245, %v246
        %263 = vadd.xlane.f32.xlu0 %v262
        %v264 = vpop.xlane.xlu0 %263
        %v265 = vadd.f32 %v247, %v248
        %266 = vadd.xlane.f32.xlu0 %v265
        %v267 = vpop.xlane.xlu0 %266
        %v268 = vadd.f32 %v249, %v250
        %269 = vadd.xlane.f32.xlu0 %v268
        %v270 = vpop.xlane.xlu0 %269
        %v271 = vadd.f32 %v251, %v252
        %272 = vadd.xlane.f32.xlu0 %v271
        %v273 = vpop.xlane.xlu0 %272
        %v274 = vadd.f32 %v253, %v254
        %275 = vadd.xlane.f32.xlu0 %v274
        %v276 = vpop.xlane.xlu0 %275
        %v277 = vadd.f32 %v255, %v256
        %278 = vadd.xlane.f32.xlu0 %v277
        %v279 = vpop.xlane.xlu0 %278
        %v280 = vadd.f32 %v257, %v258
        %281 = vadd.xlane.f32.xlu0 %v280
        %v282 = vpop.xlane.xlu0 %281
        %v283 = vmul.f32 %v261, 0.00390625
        %v284 = vmul.f32 %v264, 0.00390625
        %v285 = vmul.f32 %v267, 0.00390625
        %v286 = vmul.f32 %v270, 0.00390625
        %v287 = vmul.f32 %v273, 0.00390625
        %v288 = vmul.f32 %v276, 0.00390625
        %v289 = vmul.f32 %v279, 0.00390625
        %v290 = vmul.f32 %v282, 0.00390625
        %v291 = vld [vmem:[%s1] sm:$0xff]
        %v292 = vld [vmem:[%s1 + $0x8] sm:$0xff]
        %v293 = vld [vmem:[%s1 + $0x10] sm:$0xff]
        %v294 = vld [vmem:[%s1 + $0x18] sm:$0xff]
        %v295 = vld [vmem:[%s1 + $0x20] sm:$0xff]
        %v296 = vld [vmem:[%s1 + $0x28] sm:$0xff]
        %v297 = vld [vmem:[%s1 + $0x30] sm:$0xff]
        %v298 = vld [vmem:[%s1 + $0x38] sm:$0xff]
        %v299 = vld [vmem:[%s2] sm:$0x1]
        %v300 = vld [vmem:[%s3] sm:$0xff]
        %v301 = vld [vmem:[%s3 + $0x8] sm:$0xff]
        %v302 = vld [vmem:[%s3 + $0x10] sm:$0xff]
        %v303 = vld [vmem:[%s3 + $0x18] sm:$0xff]
        %v304 = vld [vmem:[%s3 + $0x20] sm:$0xff]
        %v305 = vld [vmem:[%s3 + $0x28] sm:$0xff]
        %v306 = vld [vmem:[%s3 + $0x30] sm:$0xff]
        %v307 = vld [vmem:[%s3 + $0x38] sm:$0xff]
        %v308 = vld [vmem:[%s4] sm:$0xff]
        %v309 = vld [vmem:[%s4 + $0x8] sm:$0xff]
        %v310 = vld [vmem:[%s4 + $0x10] sm:$0xff]
        %v311 = vld [vmem:[%s4 + $0x18] sm:$0xff]
        %v312 = vld [vmem:[%s4 + $0x20] sm:$0xff]
        %v313 = vld [vmem:[%s4 + $0x28] sm:$0xff]
        %v314 = vld [vmem:[%s4 + $0x30] sm:$0xff]
        %v315 = vld [vmem:[%s4 + $0x38] sm:$0xff]
        %v316 = vmul.f32 %v291, %v283
        %v317 = vmul.f32 %v292, %v284
        %v318 = vmul.f32 %v293, %v285
        %v319 = vmul.f32 %v294, %v286
        %v320 = vmul.f32 %v295, %v287
        %v321 = vmul.f32 %v296, %v288
        %v322 = vmul.f32 %v297, %v289
        %v323 = vmul.f32 %v298, %v290
        %vm324 = vcmask 31744
        %v325 = vsel %vm324, %v316, 0.0
        %v326 = vsel %vm324, %v317, 0.0
        %v327 = vadd.f32 %v325, %v326
        %v328 = vsel %vm324, %v318, 0.0
        %v329 = vadd.f32 %v327, %v328
        %v330 = vsel %vm324, %v319, 0.0
        %v331 = vadd.f32 %v329, %v330
        %v332 = vsel %vm324, %v320, 0.0
        %v333 = vadd.f32 %v331, %v332
        %v334 = vsel %vm324, %v321, 0.0
        %v335 = vadd.f32 %v333, %v334
        %v336 = vsel %vm324, %v322, 0.0
        %v337 = vadd.f32 %v335, %v336
        %v338 = vsel %vm324, %v323, 0.0
        %v339 = vadd.f32 %v337, %v338
        %v340 = vrot.slane %v339, 4
        %v341 = vadd.f32 %v339, %v340
        %v342 = vrot.slane %v341, 2
        %v343 = vadd.f32 %v341, %v342
        %v344 = vrot.slane %v343, 1
        %v345 = vadd.f32 %v343, %v344
        %v346 = vadd.f32 %v345, %v299
        %v347 = vmax.f32 %v346, 0.0
        %v348 = vlaneseq
        %v349 = vshrl.u32 %v348, 7
        %v350 = vsub.s32 0, %v349
        %v351 = vrot.slane %v347, %v350
        %v352 = vmul.f32 %v300, %v351
        %v353 = vmul.f32 %v301, %v351
        %v354 = vmul.f32 %v302, %v351
        %v355 = vmul.f32 %v303, %v351
        %v356 = vmul.f32 %v304, %v351
        %v357 = vmul.f32 %v305, %v351
        %v358 = vmul.f32 %v306, %v351
        %v359 = vmul.f32 %v307, %v351
        %v360 = vsel %vm324, %v352, 0.0
        %361 = vadd.xlane.f32.xlu0 %v360
        %v362 = vpop.xlane.xlu0 %361
        %v363 = vsel %vm324, %v353, 0.0
        %364 = vadd.xlane.f32.xlu0 %v363
        %v365 = vpop.xlane.xlu0 %364
        %v366 = vsel %vm324, %v354, 0.0
        %367 = vadd.xlane.f32.xlu0 %v366
        %v368 = vpop.xlane.xlu0 %367
        %v369 = vsel %vm324, %v355, 0.0
        %370 = vadd.xlane.f32.xlu0 %v369
        %v371 = vpop.xlane.xlu0 %370
        %v372 = vsel %vm324, %v356, 0.0
        %373 = vadd.xlane.f32.xlu0 %v372
        %v374 = vpop.xlane.xlu0 %373
        %v375 = vsel %vm324, %v357, 0.0
        %376 = vadd.xlane.f32.xlu0 %v375
        %v377 = vpop.xlane.xlu0 %376
        %v378 = vsel %vm324, %v358, 0.0
        %379 = vadd.xlane.f32.xlu0 %v378
        %v380 = vpop.xlane.xlu0 %379
        %v381 = vsel %vm324, %v359, 0.0
        %382 = vadd.xlane.f32.xlu0 %v381
        %v383 = vpop.xlane.xlu0 %382
        %v384 = vadd.f32 %v362, %v308
        %v385 = vadd.f32 %v365, %v309
        %v386 = vadd.f32 %v368, %v310
        %v387 = vadd.f32 %v371, %v311
        %v388 = vadd.f32 %v374, %v312
        %v389 = vadd.f32 %v377, %v313
        %v390 = vadd.f32 %v380, %v314
        %v391 = vadd.f32 %v383, %v315
        %v392 = vxor.u32 %v384, 2147483648
        %v393 = vxor.u32 %v385, 2147483648
        %v394 = vxor.u32 %v386, 2147483648
        %v395 = vxor.u32 %v387, 2147483648
        %v396 = vxor.u32 %v388, 2147483648
        %v397 = vxor.u32 %v389, 2147483648
        %v398 = vxor.u32 %v390, 2147483648
        %v399 = vxor.u32 %v391, 2147483648
        %v400 = vmul.f32 %v392, 1.442695
        %v401 = vpow.pop %v400
        %v402 = vmul.f32 %v393, 1.442695
        %v403 = vpow.pop %v402
        %v404 = vmul.f32 %v394, 1.442695
        %v405 = vpow.pop %v404
        %v406 = vmul.f32 %v395, 1.442695
        %v407 = vpow.pop %v406
        %v408 = vmul.f32 %v396, 1.442695
        %v409 = vpow.pop %v408
        %v410 = vmul.f32 %v397, 1.442695
        %v411 = vpow.pop %v410
        %v412 = vmul.f32 %v398, 1.442695
        %v413 = vpow.pop %v412
        %v414 = vmul.f32 %v399, 1.442695
        %v415 = vpow.pop %v414
        %v416 = vadd.f32 %v401, 1.0
        %v417 = vadd.f32 %v403, 1.0
        %v418 = vadd.f32 %v405, 1.0
        %v419 = vadd.f32 %v407, 1.0
        %v420 = vadd.f32 %v409, 1.0
        %v421 = vadd.f32 %v411, 1.0
        %v422 = vadd.f32 %v413, 1.0
        %v423 = vadd.f32 %v415, 1.0
        %v424 = vrcp.pop %v416
        %v425 = vmul.f32 1.0, %v424
        %v426 = vrcp.pop %v417
        %v427 = vmul.f32 1.0, %v426
        %v428 = vrcp.pop %v418
        %v429 = vmul.f32 1.0, %v428
        %v430 = vrcp.pop %v419
        %v431 = vmul.f32 1.0, %v430
        %v432 = vrcp.pop %v420
        %v433 = vmul.f32 1.0, %v432
        %v434 = vrcp.pop %v421
        %v435 = vmul.f32 1.0, %v434
        %v436 = vrcp.pop %v422
        %v437 = vmul.f32 1.0, %v436
        %v438 = vrcp.pop %v423
        %v439 = vmul.f32 1.0, %v438
        %441 = vset.pattern.permute.xlu0 0
        %442 = vperm.xlu0 %441, %v425
        %v443 = vpop.permute.xlu0 %442
        %446 = vset.pattern.permute.xlu0 0
        %447 = vperm.xlu0 %446, %v427
        %v448 = vpop.permute.xlu0 %447
        %451 = vset.pattern.permute.xlu0 0
        %452 = vperm.xlu0 %451, %v429
        %v453 = vpop.permute.xlu0 %452
        %456 = vset.pattern.permute.xlu0 0
        %457 = vperm.xlu0 %456, %v431
        %v458 = vpop.permute.xlu0 %457
        %461 = vset.pattern.permute.xlu0 0
        %462 = vperm.xlu0 %461, %v433
        %v463 = vpop.permute.xlu0 %462
        %466 = vset.pattern.permute.xlu0 0
        %467 = vperm.xlu0 %466, %v435
        %v468 = vpop.permute.xlu0 %467
        %471 = vset.pattern.permute.xlu0 0
        %472 = vperm.xlu0 %471, %v437
        %v473 = vpop.permute.xlu0 %472
        %476 = vset.pattern.permute.xlu0 0
        %477 = vperm.xlu0 %476, %v439
        %v478 = vpop.permute.xlu0 %477
        %v480 = vmul.f32 %v243, %v443
        %v481 = vmul.f32 %v244, %v443
        %v482 = vmul.f32 %v245, %v448
        %v483 = vmul.f32 %v246, %v448
        %v484 = vmul.f32 %v247, %v453
        %v485 = vmul.f32 %v248, %v453
        %v486 = vmul.f32 %v249, %v458
        %v487 = vmul.f32 %v250, %v458
        %v488 = vmul.f32 %v251, %v463
        %v489 = vmul.f32 %v252, %v463
        %v490 = vmul.f32 %v253, %v468
        %v491 = vmul.f32 %v254, %v468
        %v492 = vmul.f32 %v255, %v473
        %v493 = vmul.f32 %v256, %v473
        %v494 = vmul.f32 %v257, %v478
        %v495 = vmul.f32 %v258, %v478
        %496 = vst [vmem:[%s242] sm:$0xff] %v480
        %497 = vst [vmem:[%s242 + $0x8] sm:$0xff] %v481
        %498 = vst [vmem:[%s242 + $0x10] sm:$0xff] %v482
        %499 = vst [vmem:[%s242 + $0x18] sm:$0xff] %v483
        %500 = vst [vmem:[%s242 + $0x20] sm:$0xff] %v484
        %501 = vst [vmem:[%s242 + $0x28] sm:$0xff] %v485
        %502 = vst [vmem:[%s242 + $0x30] sm:$0xff] %v486
        %503 = vst [vmem:[%s242 + $0x38] sm:$0xff] %v487
        %504 = vst [vmem:[%s242 + $0x40] sm:$0xff] %v488
        %505 = vst [vmem:[%s242 + $0x48] sm:$0xff] %v489
        %506 = vst [vmem:[%s242 + $0x50] sm:$0xff] %v490
        %507 = vst [vmem:[%s242 + $0x58] sm:$0xff] %v491
        %508 = vst [vmem:[%s242 + $0x60] sm:$0xff] %v492
        %509 = vst [vmem:[%s242 + $0x68] sm:$0xff] %v493
        %510 = vst [vmem:[%s242 + $0x70] sm:$0xff] %v494
        %511 = vst [vmem:[%s242 + $0x78] sm:$0xff] %v495
        %s512 = sand.u32 %s140, 1
        %s513 = scalar_lea.sflag [#allocation4], %s512
        %s514 = sand.u32 %s140, 1
        %s515 = smul.addr %s514, 128
        %s516 = scalar_lea.vmem [#allocation5], %s515
        // Predicated region
        $region45: #{tpu_custom_call.1} parent=39 // pred_check
          %p517 = pneg %p150
        $region46: #{tpu_custom_call.1} parent=39 // pred_check_branch
          %519 = sbr.rel (%p517) target = $region48
        $region47: #{tpu_custom_call.1} parent=39 // pred_region
          %s521 = ssub.s32 2048, 2048
          %522 = vsyncadd %s513, %s521
          %s523 = smul.addr %s22, 16
          %s524 = smul.addr %s523, 128
          %s525 = scalar_lea.hbm %s5, %s524
          %s526 = sshll.u32 %s516, 4
          %s527 = int_to_ptr.vmem [resolvable:$true] %s526
          %532 = dma.vmem_to_hbm [thread:$0]  %s527, 2048, %s525, %s513, 256, 256, 16
        $region48: #{tpu_custom_call.1} parent=39 // pred_fallthru
          _
      $region40: #{tpu_custom_call.1} parent=5 // pred_fallthru
        _
      %p533 = scmp.le.s32.totalorder 2, %s17
      // Predicated region
      $region49: #{tpu_custom_call.1} parent=5 // pred_check
        %p534 = pneg %p533
      $region50: #{tpu_custom_call.1} parent=5 // pred_check_branch
        %536 = sbr.rel (%p534) target = $region52
      $region51: #{tpu_custom_call.1} parent=5 // pred_region
        %s537 = ssub.s32 %s17, 2
        // Predicated region
        $region53: #{tpu_custom_call.1} parent=51 // pred_check
          %p538 = pneg %p156
        $region54: #{tpu_custom_call.1} parent=51 // pred_check_branch
          %540 = sbr.rel (%p538) target = $region56
        $region55: #{tpu_custom_call.1} parent=51 // pred_region
          %s541 = sand.u32 %s141, 1
          %s542 = scalar_lea.sflag [#allocation4], %s541
          %s543 = sand.u32 %s141, 1
          %s544 = smul.addr %s543, 128
          %s545 = scalar_lea.vmem [#allocation5], %s544
          %546 = dma.done %s542, 2048
        $region56: #{tpu_custom_call.1} parent=51 // pred_fallthru
          _
      $region52: #{tpu_custom_call.1} parent=5 // pred_fallthru
        _
    $region6: #{tpu_custom_call.1} parent=1 // loop_footer
      %s21 = sadd.s32 1, %s17
    $region7: #{tpu_custom_call.1} parent=1 // loop_footer_branch
      %16 = sbr.rel target = $region3
    $region8: #{tpu_custom_call.1} parent=1 // loop_exit
      _
    %547 = vsyncpa [#allocation3], 1
    %s548 = scalar_lea.sflag [#allocation3], 1
    %549 = vsyncpa %s548, 1
    %550 = vsyncpa [#allocation4], 1
    %s551 = scalar_lea.sflag [#allocation4], 1
    %552 = vsyncpa %s551, 1

</llo_original>
